<compile_context>
chip_gen: v5e
topology: v5e:2x2
jax: 0.10.0
libtpu: 0.0.40
codegen_flags: <defaults>
</compile_context>

<pallas_src>
import functools
from typing import NamedTuple

import numpy as np
import jax
import jax.numpy as jnp
from jax.experimental import pallas as pl
from jax.experimental.pallas import tpu as pltpu

NEG_SLOPE = 0.02
LN_EPS = 1e-5
LANE = 128


def _leaky_relu(x):
    return jnp.where(x >= 0, x, NEG_SLOPE * x)


def _round_up(n, m):
    return ((n + m - 1) // m) * m


def _pad_axis(a, axis, new_size):
    pad = new_size - a.shape[axis]
    if pad == 0:
        return a
    widths = [(0, 0)] * a.ndim
    widths[axis] = (0, pad)
    return jnp.pad(a, widths)


def _pad2(a, rows, cols):
    return _pad_axis(_pad_axis(a, 0, rows), 1, cols)


class ClassifierDims(NamedTuple):
    d_in: int
    d_in_p: int
    hidden: int
    hidden_p: int
    d_out: int
    d_out_p: int


def prepare_params(params, compute_dtype=jnp.bfloat16):
    """One-time (hoisted) parameter prep: LN-affine fold, lane padding, bf16 cast.

    Call ONCE at weight-load time and reuse for every forward; doing this per
    call costs as much as the kernel itself at small model sizes.
    """
    w1, b1, gamma, beta, w2, b2 = params
    d_in, hidden = w1.shape
    d_out = w2.shape[1]
    d_in_p = _round_up(d_in, LANE)
    hidden_p = _round_up(hidden, LANE)
    d_out_p = _round_up(d_out, LANE)

    # Fold LayerNorm affine into Linear-2 (exact: LeakyReLU comes after the Linear).
    w2_f = w2 * gamma[:, None]
    b2_f = beta @ w2 + b2

    # Zero padding is exact:
    #  * padded W1 columns + zero b1 entries make the padded hidden lanes of h
    #    exactly 0, so LN sums over the padded axis equal the true-H sums
    #    (the kernel divides by the true H);
    #  * padded W2 rows are zero, so the normalized padded lanes contribute 0;
    #  * padded W1 rows are zero, so zero-padded x columns contribute 0.
    w1_p = _pad2(w1, d_in_p, hidden_p).astype(compute_dtype)
    b1_p = _pad_axis(b1, 0, hidden_p).reshape(1, hidden_p).astype(jnp.float32)
    w2_p = _pad2(w2_f, hidden_p, d_out_p).astype(compute_dtype)
    b2_p = _pad_axis(b2_f, 0, d_out_p).reshape(1, d_out_p).astype(jnp.float32)

    dims = ClassifierDims(d_in, d_in_p, hidden, hidden_p, d_out, d_out_p)
    return (w1_p, b1_p, w2_p, b2_p), dims


def _choose_batch_tile(batch, requested, *, min_tile=128, max_tile=512, target_steps=8):
    b8 = _round_up(max(batch, 1), 8)
    if requested is not None:
        bt = _round_up(min(requested, b8), 8)          # always a multiple of 8
    else:
        # Aim for ~target_steps grid steps (>=3-4 per v7x TensorCore once B is
        # large) so pipelining hides the x DMA / y writeback; tiny batches stay
        # single-step since the ~0.35us/step overhead would dominate.
        bt = _round_up(pl.cdiv(batch, target_steps), 8)
        bt = min(max(bt, min_tile), max_tile)
    return max(8, min(bt, b8))


def _make_kernel(inv_hidden, compute_dtype):
    def kernel(x_ref, w1_ref, b1_ref, w2_ref, b2_ref, o_ref):
        # Cast the streaming x tile to bf16 in-kernel (hidden under DMA/MXU)
        # instead of a separate HBM round-trip pre-pass in the wrapper.
        x = x_ref[...].astype(compute_dtype)

        # Linear 1 (bf16 operands, f32 MXU accumulation) + LeakyReLU(0.02).
        h = jnp.dot(x, w1_ref[...], preferred_element_type=jnp.float32)
        h = _leaky_relu(h + b1_ref[...])

        # LayerNorm over the hidden dim: single-pass stats, divide by the TRUE
        # hidden size (padded hidden lanes are exactly zero).
        s1 = jnp.sum(h, axis=-1, keepdims=True)
        s2 = jnp.sum(h * h, axis=-1, keepdims=True)
        mean = s1 * inv_hidden
        var = s2 * inv_hidden - mean * mean
        hn = (h - mean) * jax.lax.rsqrt(var + LN_EPS)   # rsqrt -> EUP slot (free)

        # Linear 2 (gamma/beta already folded into W2/b2) + LeakyReLU(0.02).
        y = jnp.dot(hn.astype(compute_dtype), w2_ref[...],
                    preferred_element_type=jnp.float32)
        y = _leaky_relu(y + b2_ref[...])

        o_ref[...] = y.astype(o_ref.dtype)

    return kernel


@functools.partial(
    jax.jit,
    static_argnames=("dims", "batch_tile", "out_dtype", "compute_dtype", "return_padded"),
)
def classifier_forward(x, prepared, *, dims, batch_tile=None, out_dtype=None,
                       compute_dtype=jnp.bfloat16, return_padded=False):
    """Hot path: pallas_call only (plus x pad / output slice only when required).

    `prepared, dims = prepare_params(params)` must be computed once, outside
    the per-call path.  For large B, pass out_dtype=jnp.bfloat16 to halve the
    output writeback, or return_padded=True to skip the post-slice copy.
    """
    w1_p, b1_p, w2_p, b2_p = prepared
    batch, d_in = x.shape
    assert d_in == dims.d_in, (d_in, dims.d_in)
    out_dtype = np.dtype(x.dtype) if out_dtype is None else np.dtype(out_dtype)

    bt = _choose_batch_tile(batch, batch_tile)
    b_p = _round_up(batch, bt)

    # Per-call input prep only when strictly required (none at all when D_in is
    # a lane multiple and B divides the tile — the common inference case).
    x_p = x
    if dims.d_in_p != d_in:
        x_p = _pad_axis(x_p, 1, dims.d_in_p)
    if b_p != batch:
        x_p = _pad_axis(x_p, 0, b_p)

    grid = (b_p // bt,)
    x_bytes = np.dtype(x.dtype).itemsize
    w_bytes = np.dtype(w1_p.dtype).itemsize
    o_bytes = out_dtype.itemsize

    # VMEM budget: double-buffered x/out tiles + (double-buffered) resident
    # weights + f32 temporaries, 2x headroom; floor 32 MiB, cap 64 MiB (v7x
    # physical; also covers v5e's 16 MiB scoped default).
    vmem_est = (2 * bt * dims.d_in_p * x_bytes
                + 2 * (dims.d_in_p * dims.hidden_p + dims.hidden_p * dims.d_out_p) * w_bytes
                + 2 * (dims.hidden_p + dims.d_out_p) * 4
                + 2 * bt * dims.d_out_p * o_bytes
                + 4 * bt * dims.hidden_p * 4)
    vmem_limit = int(min(max(2 * vmem_est, 32 * 1024 * 1024), 64 * 1024 * 1024))

    cost = pl.CostEstimate(
        flops=2 * b_p * (dims.d_in_p * dims.hidden_p + dims.hidden_p * dims.d_out_p)
        + 12 * b_p * dims.hidden_p,
        transcendentals=b_p,
        bytes_accessed=(b_p * dims.d_in_p * x_bytes
                        + (dims.d_in_p * dims.hidden_p
                           + dims.hidden_p * dims.d_out_p) * w_bytes
                        + (dims.hidden_p + dims.d_out_p) * 4
                        + b_p * dims.d_out_p * o_bytes),
    )

    out = pl.pallas_call(
        _make_kernel(1.0 / dims.hidden, compute_dtype),
        out_shape=jax.ShapeDtypeStruct((b_p, dims.d_out_p), out_dtype),
        grid_spec=pltpu.PrefetchScalarGridSpec(
            num_scalar_prefetch=0,
            grid=grid,
            in_specs=[
                pl.BlockSpec((bt, dims.d_in_p), lambda i: (i, 0)),              # x tile
                pl.BlockSpec((dims.d_in_p, dims.hidden_p), lambda i: (0, 0)),   # W1 (resident)
                pl.BlockSpec((1, dims.hidden_p), lambda i: (0, 0)),             # b1
                pl.BlockSpec((dims.hidden_p, dims.d_out_p), lambda i: (0, 0)),  # W2' (LN folded)
                pl.BlockSpec((1, dims.d_out_p), lambda i: (0, 0)),              # b2' (LN folded)
            ],
            out_specs=pl.BlockSpec((bt, dims.d_out_p), lambda i: (i, 0)),       # lane-dense vst
        ),
        compiler_params=pltpu.CompilerParams(
            dimension_semantics=("parallel",),
            vmem_limit_bytes=vmem_limit,
        ),
        cost_estimate=cost,
    )(x_p, w1_p, b1_p, w2_p, b2_p)

    if return_padded:
        return out  # (b_p, d_out_p) slab; caller is responsible for ignoring padding
    if b_p != batch or dims.d_out_p != dims.d_out:
        out = out[:batch, :dims.d_out]
    return out


def init_params(key, input_size, hidden_size, output_size):
    # PyTorch-style uniform bounds for the linears; non-trivial gamma/beta to
    # exercise the LayerNorm-affine fold in the test.
    k1, k2, k3, k4, k5, k6 = jax.random.split(key, 6)
    bound1 = 1.0 / (input_size ** 0.5)
    bound2 = 1.0 / (hidden_size ** 0.5)
    w1 = jax.random.uniform(k1, (input_size, hidden_size), jnp.float32, -bound1, bound1)
    b1 = jax.random.uniform(k2, (hidden_size,), jnp.float32, -bound1, bound1)
    gamma = 1.0 + 0.1 * jax.random.normal(k5, (hidden_size,), jnp.float32)
    beta = 0.1 * jax.random.normal(k6, (hidden_size,), jnp.float32)
    w2 = jax.random.uniform(k3, (hidden_size, output_size), jnp.float32, -bound2, bound2)
    b2 = jax.random.uniform(k4, (output_size,), jnp.float32, -bound2, bound2)
    return (w1, b1, gamma, beta, w2, b2)


def reference_forward(x, params):
    # Pure-JAX f32 reference for correctness checking.
    w1, b1, gamma, beta, w2, b2 = params
    h = _leaky_relu(x @ w1 + b1)
    mean = jnp.mean(h, axis=-1, keepdims=True)
    var = jnp.mean((h - mean) ** 2, axis=-1, keepdims=True)
    hn = (h - mean) * jax.lax.rsqrt(var + LN_EPS) * gamma + beta
    return _leaky_relu(hn @ w2 + b2)


if __name__ == "__main__":
    input_size, hidden_size, output_size = 128, 128, 16
    batch = 512   # -> bt=128, 4 grid steps (2 per v7x TensorCore)

    key = jax.random.PRNGKey(0)
    kx, kp = jax.random.split(key)
    x = jax.random.normal(kx, (batch, input_size), jnp.float32)
    params = init_params(kp, input_size, hidden_size, output_size)

    # Hoisted one-time parameter prep (fold + pad + bf16 cast), reused per call.
    prepared, dims = prepare_params(params)
    prepared = jax.block_until_ready(prepared)

    out = classifier_forward(x, prepared, dims=dims)
    out = jax.block_until_ready(out)

    ref = reference_forward(x, params)
    assert out.shape == (batch, output_size)
    # bf16 matmul operands (f32 accumulation) vs. the pure-f32 reference.
    err = float(jnp.max(jnp.abs(out - ref)))
    assert jnp.allclose(out, ref, atol=3e-2, rtol=3e-2), f"mismatch vs reference, max abs err {err}"

    print("KERNEL_OK")
</pallas_src>

<mosaic_0001>
module attributes {stable_mosaic.version = 11 : i64} {
  func.func @kernel(%arg0: i32, %arg1: memref<128x128xf32, #tpu.memory_space<vmem>>, %arg2: memref<128x128xbf16, #tpu.memory_space<vmem>>, %arg3: memref<1x128xf32, #tpu.memory_space<vmem>>, %arg4: memref<128x128xbf16, #tpu.memory_space<vmem>>, %arg5: memref<1x128xf32, #tpu.memory_space<vmem>>, %arg6: memref<128x128xf32, #tpu.memory_space<vmem>>) attributes {dimension_semantics = [#tpu.dimension_semantics<parallel>], iteration_bounds = array<i64: 4>, scalar_prefetch = 0 : i64, scratch_operands = 0 : i64, tpu.core_type = #tpu.core_type<tc>, window_params = [{transform_indices = @transform_0, window_bounds = array<i64: 128, 128>}, {pipeline_mode = #tpu.pipeline_mode<synchronous>, transform_indices = @transform_1, window_bounds = array<i64: 128, 128>}, {pipeline_mode = #tpu.pipeline_mode<synchronous>, transform_indices = @transform_2, window_bounds = array<i64: 1, 128>}, {pipeline_mode = #tpu.pipeline_mode<synchronous>, transform_indices = @transform_3, window_bounds = array<i64: 128, 128>}, {pipeline_mode = #tpu.pipeline_mode<synchronous>, transform_indices = @transform_4, window_bounds = array<i64: 1, 128>}, {transform_indices = @transform_5, window_bounds = array<i64: 128, 128>}]} {
    %c0 = arith.constant 0 : index
    %c0_0 = arith.constant 0 : index
    %0 = vector.load %arg1[%c0, %c0_0] : memref<128x128xf32, #tpu.memory_space<vmem>>, vector<128x128xf32>
    %1 = arith.truncf %0 : vector<128x128xf32> to vector<128x128xbf16>
    %c0_1 = arith.constant 0 : index
    %c0_2 = arith.constant 0 : index
    %2 = vector.load %arg2[%c0_1, %c0_2] : memref<128x128xbf16, #tpu.memory_space<vmem>>, vector<128x128xbf16>
    %cst = arith.constant dense<0.000000e+00> : vector<128x128xf32>
    %3 = tpu.matmul %1, %2, %cst {dimension_numbers = #tpu.dot_dimension_numbers<[1], [0], [0], [1], [0, 0, 1, 1], [], []>} : vector<128x128xbf16>, vector<128x128xbf16>, vector<128x128xf32> -> vector<128x128xf32>
    %c0_3 = arith.constant 0 : index
    %c0_4 = arith.constant 0 : index
    %4 = vector.load %arg3[%c0_3, %c0_4] : memref<1x128xf32, #tpu.memory_space<vmem>>, vector<1x128xf32>
    %5 = vector.broadcast %4 : vector<1x128xf32> to vector<128x128xf32>
    %6 = arith.addf %3, %5 : vector<128x128xf32>
    %cst_5 = arith.constant 0.000000e+00 : f32
    %7 = vector.broadcast %cst_5 : f32 to vector<128x128xf32>
    %8 = arith.cmpf oge, %6, %7 : vector<128x128xf32>
    %cst_6 = arith.constant 2.000000e-02 : f32
    %9 = vector.broadcast %cst_6 : f32 to vector<128x128xf32>
    %10 = arith.mulf %9, %6 : vector<128x128xf32>
    %11 = arith.select %8, %6, %10 : vector<128x128xi1>, vector<128x128xf32>
    %cst_7 = arith.constant dense<0.000000e+00> : vector<128xf32>
    %12 = vector.multi_reduction <add>, %11, %cst_7 [1] : vector<128x128xf32> to vector<128xf32>
    %13 = vector.shape_cast %12 : vector<128xf32> to vector<128x1xf32>
    %14 = arith.mulf %11, %11 : vector<128x128xf32>
    %cst_8 = arith.constant dense<0.000000e+00> : vector<128xf32>
    %15 = vector.multi_reduction <add>, %14, %cst_8 [1] : vector<128x128xf32> to vector<128xf32>
    %16 = vector.shape_cast %15 : vector<128xf32> to vector<128x1xf32>
    %cst_9 = arith.constant 7.812500e-03 : f32
    %17 = vector.broadcast %cst_9 : f32 to vector<128x1xf32>
    %18 = arith.mulf %13, %17 : vector<128x1xf32>
    %cst_10 = arith.constant 7.812500e-03 : f32
    %19 = vector.broadcast %cst_10 : f32 to vector<128x1xf32>
    %20 = arith.mulf %16, %19 : vector<128x1xf32>
    %21 = arith.mulf %18, %18 : vector<128x1xf32>
    %22 = arith.subf %20, %21 : vector<128x1xf32>
    %23 = vector.broadcast %18 : vector<128x1xf32> to vector<128x128xf32>
    %24 = arith.subf %11, %23 : vector<128x128xf32>
    %cst_11 = arith.constant 9.99999974E-6 : f32
    %25 = vector.broadcast %cst_11 : f32 to vector<128x1xf32>
    %26 = arith.addf %22, %25 : vector<128x1xf32>
    %27 = math.rsqrt %26 : vector<128x1xf32>
    %28 = vector.broadcast %27 : vector<128x1xf32> to vector<128x128xf32>
    %29 = arith.mulf %24, %28 : vector<128x128xf32>
    %30 = arith.truncf %29 : vector<128x128xf32> to vector<128x128xbf16>
    %c0_12 = arith.constant 0 : index
    %c0_13 = arith.constant 0 : index
    %31 = vector.load %arg4[%c0_12, %c0_13] : memref<128x128xbf16, #tpu.memory_space<vmem>>, vector<128x128xbf16>
    %cst_14 = arith.constant dense<0.000000e+00> : vector<128x128xf32>
    %32 = tpu.matmul %30, %31, %cst_14 {dimension_numbers = #tpu.dot_dimension_numbers<[1], [0], [0], [1], [0, 0, 1, 1], [], []>} : vector<128x128xbf16>, vector<128x128xbf16>, vector<128x128xf32> -> vector<128x128xf32>
    %c0_15 = arith.constant 0 : index
    %c0_16 = arith.constant 0 : index
    %33 = vector.load %arg5[%c0_15, %c0_16] : memref<1x128xf32, #tpu.memory_space<vmem>>, vector<1x128xf32>
    %34 = vector.broadcast %33 : vector<1x128xf32> to vector<128x128xf32>
    %35 = arith.addf %32, %34 : vector<128x128xf32>
    %cst_17 = arith.constant 0.000000e+00 : f32
    %36 = vector.broadcast %cst_17 : f32 to vector<128x128xf32>
    %37 = arith.cmpf oge, %35, %36 : vector<128x128xf32>
    %cst_18 = arith.constant 2.000000e-02 : f32
    %38 = vector.broadcast %cst_18 : f32 to vector<128x128xf32>
    %39 = arith.mulf %38, %35 : vector<128x128xf32>
    %40 = arith.select %37, %35, %39 : vector<128x128xi1>, vector<128x128xf32>
    %c0_19 = arith.constant 0 : index
    %c0_20 = arith.constant 0 : index
    %41 = vector.load %arg6[%c0_19, %c0_20] : memref<128x128xf32, #tpu.memory_space<vmem>>, vector<128x128xf32>
    tpu.vector_store %arg6[%c0_19, %c0_20], %40 {strides = array<i32>} : memref<128x128xf32, #tpu.memory_space<vmem>>, vector<128x128xf32>,
    return
  }
  func.func @transform_0(%arg0: i32) -> (i32, i32) {
    %c0_i32 = arith.constant 0 : i32
    %c0_i32_0 = arith.constant 0 : i32
    return %arg0, %c0_i32 : i32, i32
  }
  func.func @transform_1(%arg0: i32) -> (i32, i32) {
    %c0_i32 = arith.constant 0 : i32
    %c0_i32_0 = arith.constant 0 : i32
    %c0_i32_1 = arith.constant 0 : i32
    return %c0_i32, %c0_i32_0 : i32, i32
  }
  func.func @transform_2(%arg0: i32) -> (i32, i32) {
    %c0_i32 = arith.constant 0 : i32
    %c0_i32_0 = arith.constant 0 : i32
    %c0_i32_1 = arith.constant 0 : i32
    return %c0_i32, %c0_i32_0 : i32, i32
  }
  func.func @transform_3(%arg0: i32) -> (i32, i32) {
    %c0_i32 = arith.constant 0 : i32
    %c0_i32_0 = arith.constant 0 : i32
    %c0_i32_1 = arith.constant 0 : i32
    return %c0_i32, %c0_i32_0 : i32, i32
  }
  func.func @transform_4(%arg0: i32) -> (i32, i32) {
    %c0_i32 = arith.constant 0 : i32
    %c0_i32_0 = arith.constant 0 : i32
    %c0_i32_1 = arith.constant 0 : i32
    return %c0_i32, %c0_i32_0 : i32, i32
  }
  func.func @transform_5(%arg0: i32) -> (i32, i32) {
    %c0_i32 = arith.constant 0 : i32
    %c0_i32_0 = arith.constant 0 : i32
    return %arg0, %c0_i32 : i32, i32
  }
}

</mosaic_0001>

<llo_original>
// kernel: classifier_forward.1
$region0: #{classifier_forward.1}
  #allocation0 [shape = 'u32[]', space=smem, size = 0x4, offset = 0x4, fixed_abs, tag = 'smem constant byte address 0x4 - core index']
  #allocation1 [shape = 'u32[72,128]{1,0:T(1,128)}', space=vmem, size = 0x9000, scoped, tag = 'internal scratch']
  %s0 = inlined_call_operand.hbm [shape: f32[512,128], index: 0, kind: input, shape index: {}]
  %s1 = inlined_call_operand.hbm [shape: bf16[128,128], index: 1, kind: input, shape index: {}]
  %s2 = inlined_call_operand.vmem [shape: f32[1,128], index: 2, kind: input, shape index: {}]
  %s3 = inlined_call_operand.hbm [shape: bf16[128,128], index: 3, kind: input, shape index: {}]
  %s4 = inlined_call_operand.vmem [shape: f32[1,128], index: 4, kind: input, shape index: {}]
  %s5 = inlined_call_operand.vmem [shape: f32[512,128], index: 5, kind: output, shape index: {}]
  %s6 = sld [smem:[#allocation0]]
  $region65: #{classifier_forward.1} parent=0
    _
  %s8 = ssub.s32 1, %s6
  %s9 = scalar_select 0, %s8, %s6
  $region1: #{classifier_forward.1} parent=0
    #allocation2 [shape = 'u8[131072]{0}', space=vmem, size = 0x20000, scoped, tag = 'input window, operand 0']
    #allocation3 [shape = 's32[2]{0}', space=sflag, size = 0x8, scoped, tag = 'scoped memory for classifier_forward.1']
    #allocation4 [shape = 'u8[32768]{0}', space=vmem, size = 0x8000, scoped, tag = 'input window, operand 1, single buffered']
    #allocation5 [shape = 's32[1]{0}', space=sflag, size = 0x4, scoped, tag = 'scoped memory for classifier_forward.1']
    #allocation6 [shape = 'u8[32768]{0}', space=vmem, size = 0x8000, scoped, tag = 'input window, operand 3, single buffered']
    %10 = vsyncpa [#allocation3], 0
    %s11 = scalar_lea.sflag [#allocation3], 1
    %12 = vsyncpa %s11, 0
    %13 = vsyncpa [#allocation5], 0
    loop: start=0, step=1, limit=6
    $region2: #{classifier_forward.1} parent=1 // loop_pre_header
      _
    $region3: #{classifier_forward.1} parent=1 // loop_header
      %s15 = sphi 0, %s19
      %p16 = scmp.ge.s32.totalorder %s15, 6
      %s25 = sphi 0, %s27
      %s28 = sphi 0, %s25
      %s29 = sphi 0, %s28
      %s45 = sphi 0, %s29
      %s49 = sphi 0, %s49
      %s51 = sphi 0, %s49
      %s52 = sphi 0, %s51
      %s66 = sphi 0, %s52
      %s70 = sphi 0, %s70
      %s72 = sphi 0, %s70
      %s73 = sphi 0, %s72
      %s87 = sphi 0, %s73
      %s91 = sphi 0, %s91
      %s93 = sphi 0, %s91
      %s94 = sphi 0, %s93
      %s108 = sphi 0, %s94
      %s112 = sphi 0, %s112
      %s114 = sphi 0, %s112
      %s115 = sphi 0, %s114
      %s129 = sphi 0, %s115
      %s135 = sphi 0, %s137
      %s138 = sphi 0, %s135
      %s139 = sphi 0, %s138
      %s155 = sphi 0, %s139
    $region4: #{classifier_forward.1} parent=1 // loop_header_branch
      %18 = sbr.rel (%p16) target = $region8
    $region5: #{classifier_forward.1} parent=1 // loop_body
      %s20 = ssub.s32 %s15, 1
      %s21 = ssub.s32 %s15, 2
      %s22 = sadd.s32 %s15, 1
      %s23 = ssub.s32 %s15, %s22
      %p24 = scmp.eq.s32.totalorder %s23, 0
      %s26 = sadd.s32 %s25, 1
      %s27 = scalar_select %p24, %s25, %s26
      %p30 = pneg %p24
      %p31 = scmp.eq.s32.totalorder %s15, 3
      %p32 = por %p30, %p31
      %p33 = scmp.ne.s32.totalorder %s25, %s28
      %p34 = scmp.eq.s32.totalorder %s15, 0
      %p35 = por %p33, %p34
      %p36 = scmp.ne.s32.totalorder %s25, %s28
      %p37 = scmp.eq.s32.totalorder %s20, 3
      %p38 = por %p36, %p37
      %p39 = scmp.ne.s32.totalorder %s28, %s29
      %p40 = scmp.eq.s32.totalorder %s20, 0
      %p41 = por %p39, %p40
      %p42 = scmp.ne.s32.totalorder %s28, %s29
      %p43 = scmp.eq.s32.totalorder %s21, 3
      %p44 = por %p42, %p43
      %p46 = scmp.ne.s32.totalorder %s29, %s45
      %p47 = scmp.eq.s32.totalorder %s21, 0
      %p48 = por %p46, %p47
      %s50 = sadd.s32 %s49, 1
      %p53 = scmp.eq.s32.totalorder %s15, 3
      %p54 = scmp.ne.s32.totalorder %s49, %s51
      %p55 = scmp.eq.s32.totalorder %s15, 0
      %p56 = por %p54, %p55
      %p57 = scmp.ne.s32.totalorder %s49, %s51
      %p58 = scmp.eq.s32.totalorder %s20, 3
      %p59 = por %p57, %p58
      %p60 = scmp.ne.s32.totalorder %s51, %s52
      %p61 = scmp.eq.s32.totalorder %s20, 0
      %p62 = por %p60, %p61
      %p63 = scmp.ne.s32.totalorder %s51, %s52
      %p64 = scmp.eq.s32.totalorder %s21, 3
      %p65 = por %p63, %p64
      %p67 = scmp.ne.s32.totalorder %s52, %s66
      %p68 = scmp.eq.s32.totalorder %s21, 0
      %p69 = por %p67, %p68
      %s71 = sadd.s32 %s70, 1
      %p74 = scmp.eq.s32.totalorder %s15, 3
      %p75 = scmp.ne.s32.totalorder %s70, %s72
      %p76 = scmp.eq.s32.totalorder %s15, 0
      %p77 = por %p75, %p76
      %p78 = scmp.ne.s32.totalorder %s70, %s72
      %p79 = scmp.eq.s32.totalorder %s20, 3
      %p80 = por %p78, %p79
      %p81 = scmp.ne.s32.totalorder %s72, %s73
      %p82 = scmp.eq.s32.totalorder %s20, 0
      %p83 = por %p81, %p82
      %p84 = scmp.ne.s32.totalorder %s72, %s73
      %p85 = scmp.eq.s32.totalorder %s21, 3
      %p86 = por %p84, %p85
      %p88 = scmp.ne.s32.totalorder %s73, %s87
      %p89 = scmp.eq.s32.totalorder %s21, 0
      %p90 = por %p88, %p89
      %s92 = sadd.s32 %s91, 1
      %p95 = scmp.eq.s32.totalorder %s15, 3
      %p96 = scmp.ne.s32.totalorder %s91, %s93
      %p97 = scmp.eq.s32.totalorder %s15, 0
      %p98 = por %p96, %p97
      %p99 = scmp.ne.s32.totalorder %s91, %s93
      %p100 = scmp.eq.s32.totalorder %s20, 3
      %p101 = por %p99, %p100
      %p102 = scmp.ne.s32.totalorder %s93, %s94
      %p103 = scmp.eq.s32.totalorder %s20, 0
      %p104 = por %p102, %p103
      %p105 = scmp.ne.s32.totalorder %s93, %s94
      %p106 = scmp.eq.s32.totalorder %s21, 3
      %p107 = por %p105, %p106
      %p109 = scmp.ne.s32.totalorder %s94, %s108
      %p110 = scmp.eq.s32.totalorder %s21, 0
      %p111 = por %p109, %p110
      %s113 = sadd.s32 %s112, 1
      %p116 = scmp.eq.s32.totalorder %s15, 3
      %p117 = scmp.ne.s32.totalorder %s112, %s114
      %p118 = scmp.eq.s32.totalorder %s15, 0
      %p119 = por %p117, %p118
      %p120 = scmp.ne.s32.totalorder %s112, %s114
      %p121 = scmp.eq.s32.totalorder %s20, 3
      %p122 = por %p120, %p121
      %p123 = scmp.ne.s32.totalorder %s114, %s115
      %p124 = scmp.eq.s32.totalorder %s20, 0
      %p125 = por %p123, %p124
      %p126 = scmp.ne.s32.totalorder %s114, %s115
      %p127 = scmp.eq.s32.totalorder %s21, 3
      %p128 = por %p126, %p127
      %p130 = scmp.ne.s32.totalorder %s115, %s129
      %p131 = scmp.eq.s32.totalorder %s21, 0
      %p132 = por %p130, %p131
      %s133 = ssub.s32 %s15, %s22
      %p134 = scmp.eq.s32.totalorder %s133, 0
      %s136 = sadd.s32 %s135, 1
      %s137 = scalar_select %p134, %s135, %s136
      %p140 = pneg %p134
      %p141 = scmp.eq.s32.totalorder %s15, 3
      %p142 = por %p140, %p141
      %p143 = scmp.ne.s32.totalorder %s135, %s138
      %p144 = scmp.eq.s32.totalorder %s15, 0
      %p145 = por %p143, %p144
      %p146 = scmp.ne.s32.totalorder %s135, %s138
      %p147 = scmp.eq.s32.totalorder %s20, 3
      %p148 = por %p146, %p147
      %p149 = scmp.ne.s32.totalorder %s138, %s139
      %p150 = scmp.eq.s32.totalorder %s20, 0
      %p151 = por %p149, %p150
      %p152 = scmp.ne.s32.totalorder %s138, %s139
      %p153 = scmp.eq.s32.totalorder %s21, 3
      %p154 = por %p152, %p153
      %p156 = scmp.ne.s32.totalorder %s139, %s155
      %p157 = scmp.eq.s32.totalorder %s21, 0
      %p158 = por %p156, %p157
      %p159 = scmp.le.s32.totalorder 1, %s15
      %p160 = scmp.lt.s32.totalorder %s15, 5
      %p161 = pnand %p159, %p160
      %p162 = pneg %p161
      // Predicated region
      $region9: #{classifier_forward.1} parent=5 // pred_check
        _
      $region10: #{classifier_forward.1} parent=5 // pred_check_branch
        %164 = sbr.rel (%p161) target = $region12
      $region11: #{classifier_forward.1} parent=5 // pred_region
        %s165 = ssub.s32 %s15, 1
        // Predicated region
        $region13: #{classifier_forward.1} parent=11 // pred_check
          %p166 = pneg %p62
        $region14: #{classifier_forward.1} parent=11 // pred_check_branch
          %168 = sbr.rel (%p166) target = $region16
        $region15: #{classifier_forward.1} parent=11 // pred_region
          %170 = vsyncadd [#allocation5], 0
          %s171 = sshll.u32 %s1, 4
          %s172 = int_to_ptr.hbm [resolvable:$true] %s171
          %s173 = sshll.u32 [#allocation4], 4
          %s174 = int_to_ptr.vmem [resolvable:$true] %s173
          %179 = dma.hbm_to_vmem [thread:$0]  %s172, 1024, %s174, [#allocation5], 64, 64, 4
        $region16: #{classifier_forward.1} parent=11 // pred_fallthru
          _
        // Predicated region
        $region17: #{classifier_forward.1} parent=11 // pred_check
          %p180 = pneg %p83
        $region18: #{classifier_forward.1} parent=11 // pred_check_branch
          %182 = sbr.rel (%p180) target = $region20
        $region19: #{classifier_forward.1} parent=11 // pred_region
          _
        $region20: #{classifier_forward.1} parent=11 // pred_fallthru
          _
        // Predicated region
        $region21: #{classifier_forward.1} parent=11 // pred_check
          %p183 = pneg %p104
        $region22: #{classifier_forward.1} parent=11 // pred_check_branch
          %185 = sbr.rel (%p183) target = $region24
        $region23: #{classifier_forward.1} parent=11 // pred_region
          %187 = vsyncadd [#allocation5], 0
          %s188 = sshll.u32 %s3, 4
          %s189 = int_to_ptr.hbm [resolvable:$true] %s188
          %s190 = sshll.u32 [#allocation6], 4
          %s191 = int_to_ptr.vmem [resolvable:$true] %s190
          %196 = dma.hbm_to_vmem [thread:$0]  %s189, 1024, %s191, [#allocation5], 64, 64, 4
        $region24: #{classifier_forward.1} parent=11 // pred_fallthru
          _
        // Predicated region
        $region25: #{classifier_forward.1} parent=11 // pred_check
          %p197 = pneg %p125
        $region26: #{classifier_forward.1} parent=11 // pred_check_branch
          %199 = sbr.rel (%p197) target = $region28
        $region27: #{classifier_forward.1} parent=11 // pred_region
          _
        $region28: #{classifier_forward.1} parent=11 // pred_fallthru
          _
      $region12: #{classifier_forward.1} parent=5 // pred_fallthru
        _
      %p200 = scmp.lt.s32.totalorder %s15, 4
      // Predicated region
      $region29: #{classifier_forward.1} parent=5 // pred_check
        %p201 = pneg %p200
      $region30: #{classifier_forward.1} parent=5 // pred_check_branch
        %203 = sbr.rel (%p201) target = $region32
      $region31: #{classifier_forward.1} parent=5 // pred_region
        // Predicated region
        $region33: #{classifier_forward.1} parent=31 // pred_check
          %p204 = pneg %p35
        $region34: #{classifier_forward.1} parent=31 // pred_check_branch
          %206 = sbr.rel (%p204) target = $region36
        $region35: #{classifier_forward.1} parent=31 // pred_region
          %s207 = sand.u32 %s25, 1
          %s208 = scalar_lea.sflag [#allocation3], %s207
          %s209 = sand.u32 %s25, 1
          %s210 = smul.addr %s209, 128
          %s211 = scalar_lea.vmem [#allocation2], %s210
          %s212 = smul.u32 16, %s15
          %214 = vsyncadd %s208, 0
          %s215 = smul.addr %s212, 8
          %s216 = scalar_lea.hbm %s0, %s215
          %s217 = sshll.u32 %s216, 4
          %s218 = int_to_ptr.hbm [resolvable:$true] %s217
          %s219 = sshll.u32 %s211, 4
          %s220 = int_to_ptr.vmem [resolvable:$true] %s219
          %225 = dma.hbm_to_vmem [thread:$0]  %s218, 2048, %s220, %s208, 128, 128, 8
        $region36: #{classifier_forward.1} parent=31 // pred_fallthru
          _
      $region32: #{classifier_forward.1} parent=5 // pred_fallthru
        _
      %p226 = scmp.le.s32.totalorder 1, %s15
      %p227 = scmp.lt.s32.totalorder %s15, 5
      %p228 = pnand %p226, %p227
      %p229 = pneg %p228
      // Predicated region
      $region37: #{classifier_forward.1} parent=5 // pred_check
        _
      $region38: #{classifier_forward.1} parent=5 // pred_check_branch
        %231 = sbr.rel (%p228) target = $region40
      $region39: #{classifier_forward.1} parent=5 // pred_region
        %s232 = ssub.s32 %s15, 1
        %s233 = sand.u32 %s28, 1
        %s234 = scalar_lea.sflag [#allocation3], %s233
        %s235 = sand.u32 %s28, 1
        %s236 = smul.addr %s235, 128
        %s237 = scalar_lea.vmem [#allocation2], %s236
        // Predicated region
        $region41: #{classifier_forward.1} parent=39 // pred_check
          %p238 = pneg %p41
        $region42: #{classifier_forward.1} parent=39 // pred_check_branch
          %240 = sbr.rel (%p238) target = $region44
        $region43: #{classifier_forward.1} parent=39 // pred_region
          %242 = dma.done %s234, 2048
        $region44: #{classifier_forward.1} parent=39 // pred_fallthru
          _
        // Predicated region
        $region45: #{classifier_forward.1} parent=39 // pred_check
          %p243 = pneg %p62
        $region46: #{classifier_forward.1} parent=39 // pred_check_branch
          %245 = sbr.rel (%p243) target = $region48
        $region47: #{classifier_forward.1} parent=39 // pred_region
          %247 = dma.done [#allocation5], 1024
        $region48: #{classifier_forward.1} parent=39 // pred_fallthru
          _
        // Predicated region
        $region49: #{classifier_forward.1} parent=39 // pred_check
          %p248 = pneg %p104
        $region50: #{classifier_forward.1} parent=39 // pred_check_branch
          %250 = sbr.rel (%p248) target = $region52
        $region51: #{classifier_forward.1} parent=39 // pred_region
          %252 = dma.done [#allocation5], 1024
        $region52: #{classifier_forward.1} parent=39 // pred_fallthru
          _
        %s253 = sand.u32 %s28, 1
        %s254 = scalar_lea.sflag [#allocation3], %s253
        %s255 = sand.u32 %s28, 1
        %s256 = smul.addr %s255, 128
        %s257 = scalar_lea.vmem [#allocation2], %s256
        %p258 = pneg %p41
        %p259 = pneg %p38
        %p260 = pneg %p62
        %p261 = pneg %p59
        %p262 = pneg %p83
        %p263 = pneg %p80
        %p264 = pneg %p104
        %p265 = pneg %p101
        %p266 = pneg %p125
        %p267 = pneg %p122
        %p268 = pneg %p151
        %p269 = pneg %p148
        %s270 = smul.u32 16, %s20
        %p271 = scmp.lt.s32.totalorder %s270, 63
        %s272 = scalar_select %p271, %s270, 63
        %s273 = smul.addr %s272, 8
        %s274 = scalar_lea.vmem %s5, %s273
        %s275 = smul.u32 16, %s20
        %s276 = smul.u32 16, %s20
        %p277 = scmp.lt.s32.totalorder %s276, 63
        %s278 = scalar_select %p277, %s276, 63
        %s279 = smul.addr %s278, 8
        %s280 = scalar_lea.vmem %s5, %s279
        %s281 = smul.u32 16, %s20
        %v282 = vld [vmem:[%s237] sm:$0xff]
        %v283 = vld [vmem:[%s237 + $0x8] sm:$0xff]
        %v284 = vld [vmem:[%s237 + $0x10] sm:$0xff]
        %v285 = vld [vmem:[%s237 + $0x18] sm:$0xff]
        %v286 = vld [vmem:[%s237 + $0x20] sm:$0xff]
        %v287 = vld [vmem:[%s237 + $0x28] sm:$0xff]
        %v288 = vld [vmem:[%s237 + $0x30] sm:$0xff]
        %v289 = vld [vmem:[%s237 + $0x38] sm:$0xff]
        %v290 = vld [vmem:[%s237 + $0x40] sm:$0xff]
        %v291 = vld [vmem:[%s237 + $0x48] sm:$0xff]
        %v292 = vld [vmem:[%s237 + $0x50] sm:$0xff]
        %v293 = vld [vmem:[%s237 + $0x58] sm:$0xff]
        %v294 = vld [vmem:[%s237 + $0x60] sm:$0xff]
        %v295 = vld [vmem:[%s237 + $0x68] sm:$0xff]
        %v296 = vld [vmem:[%s237 + $0x70] sm:$0xff]
        %v297 = vld [vmem:[%s237 + $0x78] sm:$0xff]
        %v298 = vpack.c.bf16 %v283, %v282
        %v299 = vpack.c.bf16 %v285, %v284
        %v300 = vpack.c.bf16 %v287, %v286
        %v301 = vpack.c.bf16 %v289, %v288
        %v302 = vpack.c.bf16 %v291, %v290
        %v303 = vpack.c.bf16 %v293, %v292
        %v304 = vpack.c.bf16 %v295, %v294
        %v305 = vpack.c.bf16 %v297, %v296
        %v306 = vld [vmem:[#allocation4] sm:$0xf]
        %v307 = vld [vmem:[#allocation4 + $0x4] sm:$0xf]
        %v308 = vld [vmem:[#allocation4 + $0x8] sm:$0xf]
        %v309 = vld [vmem:[#allocation4 + $0xc] sm:$0xf]
        %v310 = vld [vmem:[#allocation4 + $0x10] sm:$0xf]
        %v311 = vld [vmem:[#allocation4 + $0x14] sm:$0xf]
        %v312 = vld [vmem:[#allocation4 + $0x18] sm:$0xf]
        %v313 = vld [vmem:[#allocation4 + $0x1c] sm:$0xf]
        %v314 = vld [vmem:[#allocation4 + $0x20] sm:$0xf]
        %v315 = vld [vmem:[#allocation4 + $0x24] sm:$0xf]
        %v316 = vld [vmem:[#allocation4 + $0x28] sm:$0xf]
        %v317 = vld [vmem:[#allocation4 + $0x2c] sm:$0xf]
        %v318 = vld [vmem:[#allocation4 + $0x30] sm:$0xf]
        %v319 = vld [vmem:[#allocation4 + $0x34] sm:$0xf]
        %v320 = vld [vmem:[#allocation4 + $0x38] sm:$0xf]
        %v321 = vld [vmem:[#allocation4 + $0x3c] sm:$0xf]
        %v322 = vld [vmem:[%s2] sm:$0x1]
        %v324 = vperm.slane %v322, 0
        %v342 = vunpack.c.l.b16 %v306
        %v343 = vunpack.c.l.b16 %v307
        %v344 = vunpack.c.l.b16 %v308
        %v345 = vunpack.c.l.b16 %v309
        %v346 = vunpack.c.l.b16 %v310
        %v347 = vunpack.c.l.b16 %v311
        %v348 = vunpack.c.l.b16 %v312
        %v349 = vunpack.c.l.b16 %v313
        %v350 = vunpack.c.l.b16 %v314
        %v351 = vunpack.c.l.b16 %v315
        %v352 = vunpack.c.l.b16 %v316
        %v353 = vunpack.c.l.b16 %v317
        %v354 = vunpack.c.l.b16 %v318
        %v355 = vunpack.c.l.b16 %v319
        %v356 = vunpack.c.l.b16 %v320
        %v357 = vunpack.c.l.b16 %v321
        %v358 = vpack.c.b16 %v343, %v342
        %v359 = vpack.c.b16 %v345, %v344
        %v360 = vpack.c.b16 %v347, %v346
        %v361 = vpack.c.b16 %v349, %v348
        %v362 = vpack.c.b16 %v351, %v350
        %v363 = vpack.c.b16 %v353, %v352
        %v364 = vpack.c.b16 %v355, %v354
        %v365 = vpack.c.b16 %v357, %v356
        %374 = vmatpush.bf16.msra.mxu0 %v365
        %375 = vmatpush.bf16.msra.mxu0 %v364
        %376 = vmatpush.bf16.msra.mxu0 %v363
        %377 = vmatpush.bf16.msra.mxu0 %v362
        %378 = vmatpush.bf16.msra.mxu0 %v361
        %379 = vmatpush.bf16.msra.mxu0 %v360
        %380 = vmatpush.bf16.msra.mxu0 %v359
        %381 = vmatpush.bf16.msra.mxu0 %v358
        %382 = vmatmul.bf16.gmra.mxu0 %v298
        %v383 = vpop.f32.mrf.mxu0
        %v384 = vadd.f32 %v324, %v383
        %v385 = vpop.f32.mrf.mxu0
        %v386 = vadd.f32 %v324, %v385
        %387 = vmatmul.bf16.gmra.mxu0 %v299
        %v388 = vpop.f32.mrf.mxu0
        %v389 = vadd.f32 %v324, %v388
        %v390 = vpop.f32.mrf.mxu0
        %v391 = vadd.f32 %v324, %v390
        %392 = vmatmul.bf16.gmra.mxu0 %v300
        %v393 = vpop.f32.mrf.mxu0
        %v394 = vadd.f32 %v324, %v393
        %v395 = vpop.f32.mrf.mxu0
        %v396 = vadd.f32 %v324, %v395
        %397 = vmatmul.bf16.gmra.mxu0 %v301
        %v398 = vpop.f32.mrf.mxu0
        %v399 = vadd.f32 %v324, %v398
        %v400 = vpop.f32.mrf.mxu0
        %v401 = vadd.f32 %v324, %v400
        %402 = vmatmul.bf16.gmra.mxu0 %v302
        %v403 = vpop.f32.mrf.mxu0
        %v404 = vadd.f32 %v324, %v403
        %v405 = vpop.f32.mrf.mxu0
        %v406 = vadd.f32 %v324, %v405
        %407 = vmatmul.bf16.gmra.mxu0 %v303
        %v408 = vpop.f32.mrf.mxu0
        %v409 = vadd.f32 %v324, %v408
        %v410 = vpop.f32.mrf.mxu0
        %v411 = vadd.f32 %v324, %v410
        %412 = vmatmul.bf16.gmra.mxu0 %v304
        %v413 = vpop.f32.mrf.mxu0
        %v414 = vadd.f32 %v324, %v413
        %v415 = vpop.f32.mrf.mxu0
        %v416 = vadd.f32 %v324, %v415
        %417 = vmatmul.bf16.gmra.mxu0 %v305
        %v418 = vpop.f32.mrf.mxu0
        %v419 = vadd.f32 %v324, %v418
        %v420 = vpop.f32.mrf.mxu0
        %v421 = vadd.f32 %v324, %v420
        %422 = vdwg.mxu0
        %vm423 = vcmp.ge.f32.partialorder %v384, 0.0
        %vm424 = vcmp.ge.f32.partialorder %v386, 0.0
        %vm425 = vcmp.ge.f32.partialorder %v389, 0.0
        %vm426 = vcmp.ge.f32.partialorder %v391, 0.0
        %vm427 = vcmp.ge.f32.partialorder %v394, 0.0
        %vm428 = vcmp.ge.f32.partialorder %v396, 0.0
        %vm429 = vcmp.ge.f32.partialorder %v399, 0.0
        %vm430 = vcmp.ge.f32.partialorder %v401, 0.0
        %vm431 = vcmp.ge.f32.partialorder %v404, 0.0
        %vm432 = vcmp.ge.f32.partialorder %v406, 0.0
        %vm433 = vcmp.ge.f32.partialorder %v409, 0.0
        %vm434 = vcmp.ge.f32.partialorder %v411, 0.0
        %vm435 = vcmp.ge.f32.partialorder %v414, 0.0
        %vm436 = vcmp.ge.f32.partialorder %v416, 0.0
        %vm437 = vcmp.ge.f32.partialorder %v419, 0.0
        %vm438 = vcmp.ge.f32.partialorder %v421, 0.0
        %v439 = vmul.f32 %v384, 0.02
        %v440 = vmul.f32 %v386, 0.02
        %v441 = vmul.f32 %v389, 0.02
        %v442 = vmul.f32 %v391, 0.02
        %v443 = vmul.f32 %v394, 0.02
        %v444 = vmul.f32 %v396, 0.02
        %v445 = vmul.f32 %v399, 0.02
        %v446 = vmul.f32 %v401, 0.02
        %v447 = vmul.f32 %v404, 0.02
        %v448 = vmul.f32 %v406, 0.02
        %v449 = vmul.f32 %v409, 0.02
        %v450 = vmul.f32 %v411, 0.02
        %v451 = vmul.f32 %v414, 0.02
        %v452 = vmul.f32 %v416, 0.02
        %v453 = vmul.f32 %v419, 0.02
        %v454 = vmul.f32 %v421, 0.02
        %v455 = vsel %vm423, %v384, %v439
        %v456 = vsel %vm424, %v386, %v440
        %v457 = vsel %vm425, %v389, %v441
        %v458 = vsel %vm426, %v391, %v442
        %v459 = vsel %vm427, %v394, %v443
        %v460 = vsel %vm428, %v396, %v444
        %v461 = vsel %vm429, %v399, %v445
        %v462 = vsel %vm430, %v401, %v446
        %v463 = vsel %vm431, %v404, %v447
        %v464 = vsel %vm432, %v406, %v448
        %v465 = vsel %vm433, %v409, %v449
        %v466 = vsel %vm434, %v411, %v450
        %v467 = vsel %vm435, %v414, %v451
        %v468 = vsel %vm436, %v416, %v452
        %v469 = vsel %vm437, %v419, %v453
        %v470 = vsel %vm438, %v421, %v454
        %471 = vadd.xlane.f32.xlu0 %v455
        %v472 = vpop.xlane.xlu0 %471
        %473 = vadd.xlane.f32.xlu0 %v456
        %v474 = vpop.xlane.xlu0 %473
        %475 = vadd.xlane.f32.xlu0 %v457
        %v476 = vpop.xlane.xlu0 %475
        %477 = vadd.xlane.f32.xlu0 %v458
        %v478 = vpop.xlane.xlu0 %477
        %479 = vadd.xlane.f32.xlu0 %v459
        %v480 = vpop.xlane.xlu0 %479
        %481 = vadd.xlane.f32.xlu0 %v460
        %v482 = vpop.xlane.xlu0 %481
        %483 = vadd.xlane.f32.xlu0 %v461
        %v484 = vpop.xlane.xlu0 %483
        %485 = vadd.xlane.f32.xlu0 %v462
        %v486 = vpop.xlane.xlu0 %485
        %487 = vadd.xlane.f32.xlu0 %v463
        %v488 = vpop.xlane.xlu0 %487
        %489 = vadd.xlane.f32.xlu0 %v464
        %v490 = vpop.xlane.xlu0 %489
        %491 = vadd.xlane.f32.xlu0 %v465
        %v492 = vpop.xlane.xlu0 %491
        %493 = vadd.xlane.f32.xlu0 %v466
        %v494 = vpop.xlane.xlu0 %493
        %495 = vadd.xlane.f32.xlu0 %v467
        %v496 = vpop.xlane.xlu0 %495
        %497 = vadd.xlane.f32.xlu0 %v468
        %v498 = vpop.xlane.xlu0 %497
        %499 = vadd.xlane.f32.xlu0 %v469
        %v500 = vpop.xlane.xlu0 %499
        %501 = vadd.xlane.f32.xlu0 %v470
        %v502 = vpop.xlane.xlu0 %501
        %v503 = vmul.f32 %v455, %v455
        %v504 = vmul.f32 %v456, %v456
        %v505 = vmul.f32 %v457, %v457
        %v506 = vmul.f32 %v458, %v458
        %v507 = vmul.f32 %v459, %v459
        %v508 = vmul.f32 %v460, %v460
        %v509 = vmul.f32 %v461, %v461
        %v510 = vmul.f32 %v462, %v462
        %v511 = vmul.f32 %v463, %v463
        %v512 = vmul.f32 %v464, %v464
        %v513 = vmul.f32 %v465, %v465
        %v514 = vmul.f32 %v466, %v466
        %v515 = vmul.f32 %v467, %v467
        %v516 = vmul.f32 %v468, %v468
        %v517 = vmul.f32 %v469, %v469
        %v518 = vmul.f32 %v470, %v470
        %519 = vadd.xlane.f32.xlu0 %v503
        %v520 = vpop.xlane.xlu0 %519
        %521 = vadd.xlane.f32.xlu0 %v504
        %v522 = vpop.xlane.xlu0 %521
        %523 = vadd.xlane.f32.xlu0 %v505
        %v524 = vpop.xlane.xlu0 %523
        %525 = vadd.xlane.f32.xlu0 %v506
        %v526 = vpop.xlane.xlu0 %525
        %527 = vadd.xlane.f32.xlu0 %v507
        %v528 = vpop.xlane.xlu0 %527
        %529 = vadd.xlane.f32.xlu0 %v508
        %v530 = vpop.xlane.xlu0 %529
        %531 = vadd.xlane.f32.xlu0 %v509
        %v532 = vpop.xlane.xlu0 %531
        %533 = vadd.xlane.f32.xlu0 %v510
        %v534 = vpop.xlane.xlu0 %533
        %535 = vadd.xlane.f32.xlu0 %v511
        %v536 = vpop.xlane.xlu0 %535
        %537 = vadd.xlane.f32.xlu0 %v512
        %v538 = vpop.xlane.xlu0 %537
        %539 = vadd.xlane.f32.xlu0 %v513
        %v540 = vpop.xlane.xlu0 %539
        %541 = vadd.xlane.f32.xlu0 %v514
        %v542 = vpop.xlane.xlu0 %541
        %543 = vadd.xlane.f32.xlu0 %v515
        %v544 = vpop.xlane.xlu0 %543
        %545 = vadd.xlane.f32.xlu0 %v516
        %v546 = vpop.xlane.xlu0 %545
        %547 = vadd.xlane.f32.xlu0 %v517
        %v548 = vpop.xlane.xlu0 %547
        %549 = vadd.xlane.f32.xlu0 %v518
        %v550 = vpop.xlane.xlu0 %549
        %v551 = vmul.f32 %v472, 0.0078125
        %v552 = vmul.f32 %v474, 0.0078125
        %v553 = vmul.f32 %v476, 0.0078125
        %v554 = vmul.f32 %v478, 0.0078125
        %v555 = vmul.f32 %v480, 0.0078125
        %v556 = vmul.f32 %v482, 0.0078125
        %v557 = vmul.f32 %v484, 0.0078125
        %v558 = vmul.f32 %v486, 0.0078125
        %v559 = vmul.f32 %v488, 0.0078125
        %v560 = vmul.f32 %v490, 0.0078125
        %v561 = vmul.f32 %v492, 0.0078125
        %v562 = vmul.f32 %v494, 0.0078125
        %v563 = vmul.f32 %v496, 0.0078125
        %v564 = vmul.f32 %v498, 0.0078125
        %v565 = vmul.f32 %v500, 0.0078125
        %v566 = vmul.f32 %v502, 0.0078125
        %v567 = vmul.f32 %v520, 0.0078125
        %v568 = vmul.f32 %v522, 0.0078125
        %v569 = vmul.f32 %v524, 0.0078125
        %v570 = vmul.f32 %v526, 0.0078125
        %v571 = vmul.f32 %v528, 0.0078125
        %v572 = vmul.f32 %v530, 0.0078125
        %v573 = vmul.f32 %v532, 0.0078125
        %v574 = vmul.f32 %v534, 0.0078125
        %v575 = vmul.f32 %v536, 0.0078125
        %v576 = vmul.f32 %v538, 0.0078125
        %v577 = vmul.f32 %v540, 0.0078125
        %v578 = vmul.f32 %v542, 0.0078125
        %v579 = vmul.f32 %v544, 0.0078125
        %v580 = vmul.f32 %v546, 0.0078125
        %v581 = vmul.f32 %v548, 0.0078125
        %v582 = vmul.f32 %v550, 0.0078125
        %v583 = vmul.f32 %v551, %v551
        %v584 = vmul.f32 %v552, %v552
        %v585 = vmul.f32 %v553, %v553
        %v586 = vmul.f32 %v554, %v554
        %v587 = vmul.f32 %v555, %v555
        %v588 = vmul.f32 %v556, %v556
        %v589 = vmul.f32 %v557, %v557
        %v590 = vmul.f32 %v558, %v558
        %v591 = vmul.f32 %v559, %v559
        %v592 = vmul.f32 %v560, %v560
        %v593 = vmul.f32 %v561, %v561
        %v594 = vmul.f32 %v562, %v562
        %v595 = vmul.f32 %v563, %v563
        %v596 = vmul.f32 %v564, %v564
        %v597 = vmul.f32 %v565, %v565
        %v598 = vmul.f32 %v566, %v566
        %v599 = vsub.f32 %v567, %v583
        %v600 = vsub.f32 %v568, %v584
        %v601 = vsub.f32 %v569, %v585
        %v602 = vsub.f32 %v570, %v586
        %v603 = vsub.f32 %v571, %v587
        %v604 = vsub.f32 %v572, %v588
        %v605 = vsub.f32 %v573, %v589
        %v606 = vsub.f32 %v574, %v590
        %v607 = vsub.f32 %v575, %v591
        %v608 = vsub.f32 %v576, %v592
        %v609 = vsub.f32 %v577, %v593
        %v610 = vsub.f32 %v578, %v594
        %v611 = vsub.f32 %v579, %v595
        %v612 = vsub.f32 %v580, %v596
        %v613 = vsub.f32 %v581, %v597
        %v614 = vsub.f32 %v582, %v598
        %v615 = vsub.f32 %v455, %v551
        %v616 = vsub.f32 %v456, %v552
        %v617 = vsub.f32 %v457, %v553
        %v618 = vsub.f32 %v458, %v554
        %v619 = vsub.f32 %v459, %v555
        %v620 = vsub.f32 %v460, %v556
        %v621 = vsub.f32 %v461, %v557
        %v622 = vsub.f32 %v462, %v558
        %v623 = vsub.f32 %v463, %v559
        %v624 = vsub.f32 %v464, %v560
        %v625 = vsub.f32 %v465, %v561
        %v626 = vsub.f32 %v466, %v562
        %v627 = vsub.f32 %v467, %v563
        %v628 = vsub.f32 %v468, %v564
        %v629 = vsub.f32 %v469, %v565
        %v630 = vsub.f32 %v470, %v566
        %v631 = vadd.f32 %v599, 1e-05
        %v632 = vadd.f32 %v600, 1e-05
        %v633 = vadd.f32 %v601, 1e-05
        %v634 = vadd.f32 %v602, 1e-05
        %v635 = vadd.f32 %v603, 1e-05
        %v636 = vadd.f32 %v604, 1e-05
        %v637 = vadd.f32 %v605, 1e-05
        %v638 = vadd.f32 %v606, 1e-05
        %v639 = vadd.f32 %v607, 1e-05
        %v640 = vadd.f32 %v608, 1e-05
        %v641 = vadd.f32 %v609, 1e-05
        %v642 = vadd.f32 %v610, 1e-05
        %v643 = vadd.f32 %v611, 1e-05
        %v644 = vadd.f32 %v612, 1e-05
        %v645 = vadd.f32 %v613, 1e-05
        %v646 = vadd.f32 %v614, 1e-05
        %v647 = vrsqrt.pop %v631
        %v648 = vmul.f32 %v647, %v631
        %v649 = vmul.f32 %v648, %v647
        %v650 = vmul.f32 0.5, %v649
        %v651 = vsub.f32 1.5, %v650
        %v652 = vmul.f32 %v647, %v651
        %vm653 = vweird.f32 %v631
        %vm654 = vweird.f32 %v647
        %vm655 = vmor %vm653, %vm654
        %v656 = vsel %vm655, %v647, %v652
        %v657 = vrsqrt.pop %v632
        %v658 = vmul.f32 %v657, %v632
        %v659 = vmul.f32 %v658, %v657
        %v660 = vmul.f32 0.5, %v659
        %v661 = vsub.f32 1.5, %v660
        %v662 = vmul.f32 %v657, %v661
        %vm663 = vweird.f32 %v632
        %vm664 = vweird.f32 %v657
        %vm665 = vmor %vm663, %vm664
        %v666 = vsel %vm665, %v657, %v662
        %v667 = vrsqrt.pop %v633
        %v668 = vmul.f32 %v667, %v633
        %v669 = vmul.f32 %v668, %v667
        %v670 = vmul.f32 0.5, %v669
        %v671 = vsub.f32 1.5, %v670
        %v672 = vmul.f32 %v667, %v671
        %vm673 = vweird.f32 %v633
        %vm674 = vweird.f32 %v667
        %vm675 = vmor %vm673, %vm674
        %v676 = vsel %vm675, %v667, %v672
        %v677 = vrsqrt.pop %v634
        %v678 = vmul.f32 %v677, %v634
        %v679 = vmul.f32 %v678, %v677
        %v680 = vmul.f32 0.5, %v679
        %v681 = vsub.f32 1.5, %v680
        %v682 = vmul.f32 %v677, %v681
        %vm683 = vweird.f32 %v634
        %vm684 = vweird.f32 %v677
        %vm685 = vmor %vm683, %vm684
        %v686 = vsel %vm685, %v677, %v682
        %v687 = vrsqrt.pop %v635
        %v688 = vmul.f32 %v687, %v635
        %v689 = vmul.f32 %v688, %v687
        %v690 = vmul.f32 0.5, %v689
        %v691 = vsub.f32 1.5, %v690
        %v692 = vmul.f32 %v687, %v691
        %vm693 = vweird.f32 %v635
        %vm694 = vweird.f32 %v687
        %vm695 = vmor %vm693, %vm694
        %v696 = vsel %vm695, %v687, %v692
        %v697 = vrsqrt.pop %v636
        %v698 = vmul.f32 %v697, %v636
        %v699 = vmul.f32 %v698, %v697
        %v700 = vmul.f32 0.5, %v699
        %v701 = vsub.f32 1.5, %v700
        %v702 = vmul.f32 %v697, %v701
        %vm703 = vweird.f32 %v636
        %vm704 = vweird.f32 %v697
        %vm705 = vmor %vm703, %vm704
        %v706 = vsel %vm705, %v697, %v702
        %v707 = vrsqrt.pop %v637
        %v708 = vmul.f32 %v707, %v637
        %v709 = vmul.f32 %v708, %v707
        %v710 = vmul.f32 0.5, %v709
        %v711 = vsub.f32 1.5, %v710
        %v712 = vmul.f32 %v707, %v711
        %vm713 = vweird.f32 %v637
        %vm714 = vweird.f32 %v707
        %vm715 = vmor %vm713, %vm714
        %v716 = vsel %vm715, %v707, %v712
        %v717 = vrsqrt.pop %v638
        %v718 = vmul.f32 %v717, %v638
        %v719 = vmul.f32 %v718, %v717
        %v720 = vmul.f32 0.5, %v719
        %v721 = vsub.f32 1.5, %v720
        %v722 = vmul.f32 %v717, %v721
        %vm723 = vweird.f32 %v638
        %vm724 = vweird.f32 %v717
        %vm725 = vmor %vm723, %vm724
        %v726 = vsel %vm725, %v717, %v722
        %v727 = vrsqrt.pop %v639
        %v728 = vmul.f32 %v727, %v639
        %v729 = vmul.f32 %v728, %v727
        %v730 = vmul.f32 0.5, %v729
        %v731 = vsub.f32 1.5, %v730
        %v732 = vmul.f32 %v727, %v731
        %vm733 = vweird.f32 %v639
        %vm734 = vweird.f32 %v727
        %vm735 = vmor %vm733, %vm734
        %v736 = vsel %vm735, %v727, %v732
        %v737 = vrsqrt.pop %v640
        %v738 = vmul.f32 %v737, %v640
        %v739 = vmul.f32 %v738, %v737
        %v740 = vmul.f32 0.5, %v739
        %v741 = vsub.f32 1.5, %v740
        %v742 = vmul.f32 %v737, %v741
        %vm743 = vweird.f32 %v640
        %vm744 = vweird.f32 %v737
        %vm745 = vmor %vm743, %vm744
        %v746 = vsel %vm745, %v737, %v742
        %v747 = vrsqrt.pop %v641
        %v748 = vmul.f32 %v747, %v641
        %v749 = vmul.f32 %v748, %v747
        %v750 = vmul.f32 0.5, %v749
        %v751 = vsub.f32 1.5, %v750
        %v752 = vmul.f32 %v747, %v751
        %vm753 = vweird.f32 %v641
        %vm754 = vweird.f32 %v747
        %vm755 = vmor %vm753, %vm754
        %v756 = vsel %vm755, %v747, %v752
        %v757 = vrsqrt.pop %v642
        %v758 = vmul.f32 %v757, %v642
        %v759 = vmul.f32 %v758, %v757
        %v760 = vmul.f32 0.5, %v759
        %v761 = vsub.f32 1.5, %v760
        %v762 = vmul.f32 %v757, %v761
        %vm763 = vweird.f32 %v642
        %vm764 = vweird.f32 %v757
        %vm765 = vmor %vm763, %vm764
        %v766 = vsel %vm765, %v757, %v762
        %v767 = vrsqrt.pop %v643
        %v768 = vmul.f32 %v767, %v643
        %v769 = vmul.f32 %v768, %v767
        %v770 = vmul.f32 0.5, %v769
        %v771 = vsub.f32 1.5, %v770
        %v772 = vmul.f32 %v767, %v771
        %vm773 = vweird.f32 %v643
        %vm774 = vweird.f32 %v767
        %vm775 = vmor %vm773, %vm774
        %v776 = vsel %vm775, %v767, %v772
        %v777 = vrsqrt.pop %v644
        %v778 = vmul.f32 %v777, %v644
        %v779 = vmul.f32 %v778, %v777
        %v780 = vmul.f32 0.5, %v779
        %v781 = vsub.f32 1.5, %v780
        %v782 = vmul.f32 %v777, %v781
        %vm783 = vweird.f32 %v644
        %vm784 = vweird.f32 %v777
        %vm785 = vmor %vm783, %vm784
        %v786 = vsel %vm785, %v777, %v782
        %v787 = vrsqrt.pop %v645
        %v788 = vmul.f32 %v787, %v645
        %v789 = vmul.f32 %v788, %v787
        %v790 = vmul.f32 0.5, %v789
        %v791 = vsub.f32 1.5, %v790
        %v792 = vmul.f32 %v787, %v791
        %vm793 = vweird.f32 %v645
        %vm794 = vweird.f32 %v787
        %vm795 = vmor %vm793, %vm794
        %v796 = vsel %vm795, %v787, %v792
        %v797 = vrsqrt.pop %v646
        %v798 = vmul.f32 %v797, %v646
        %v799 = vmul.f32 %v798, %v797
        %v800 = vmul.f32 0.5, %v799
        %v801 = vsub.f32 1.5, %v800
        %v802 = vmul.f32 %v797, %v801
        %vm803 = vweird.f32 %v646
        %vm804 = vweird.f32 %v797
        %vm805 = vmor %vm803, %vm804
        %v806 = vsel %vm805, %v797, %v802
        %v807 = vmul.f32 %v615, %v656
        %v808 = vmul.f32 %v616, %v666
        %v809 = vmul.f32 %v617, %v676
        %v810 = vmul.f32 %v618, %v686
        %v811 = vmul.f32 %v619, %v696
        %v812 = vmul.f32 %v620, %v706
        %v813 = vmul.f32 %v621, %v716
        %v814 = vmul.f32 %v622, %v726
        %v815 = vmul.f32 %v623, %v736
        %v816 = vmul.f32 %v624, %v746
        %v817 = vmul.f32 %v625, %v756
        %v818 = vmul.f32 %v626, %v766
        %v819 = vmul.f32 %v627, %v776
        %v820 = vmul.f32 %v628, %v786
        %v821 = vmul.f32 %v629, %v796
        %v822 = vmul.f32 %v630, %v806
        %v823 = vpack.c.bf16 %v808, %v807
        %v824 = vpack.c.bf16 %v810, %v809
        %v825 = vpack.c.bf16 %v812, %v811
        %v826 = vpack.c.bf16 %v814, %v813
        %v827 = vpack.c.bf16 %v816, %v815
        %v828 = vpack.c.bf16 %v818, %v817
        %v829 = vpack.c.bf16 %v820, %v819
        %v830 = vpack.c.bf16 %v822, %v821
        %v831 = vld [vmem:[#allocation6] sm:$0xf]
        %v832 = vld [vmem:[#allocation6 + $0x4] sm:$0xf]
        %v833 = vld [vmem:[#allocation6 + $0x8] sm:$0xf]
        %v834 = vld [vmem:[#allocation6 + $0xc] sm:$0xf]
        %v835 = vld [vmem:[#allocation6 + $0x10] sm:$0xf]
        %v836 = vld [vmem:[#allocation6 + $0x14] sm:$0xf]
        %v837 = vld [vmem:[#allocation6 + $0x18] sm:$0xf]
        %v838 = vld [vmem:[#allocation6 + $0x1c] sm:$0xf]
        %v839 = vld [vmem:[#allocation6 + $0x20] sm:$0xf]
        %v840 = vld [vmem:[#allocation6 + $0x24] sm:$0xf]
        %v841 = vld [vmem:[#allocation6 + $0x28] sm:$0xf]
        %v842 = vld [vmem:[#allocation6 + $0x2c] sm:$0xf]
        %v843 = vld [vmem:[#allocation6 + $0x30] sm:$0xf]
        %v844 = vld [vmem:[#allocation6 + $0x34] sm:$0xf]
        %v845 = vld [vmem:[#allocation6 + $0x38] sm:$0xf]
        %v846 = vld [vmem:[#allocation6 + $0x3c] sm:$0xf]
        %v847 = vld [vmem:[%s4] sm:$0x1]
        %v849 = vperm.slane %v847, 0
        %v867 = vunpack.c.l.b16 %v831
        %v868 = vunpack.c.l.b16 %v832
        %v869 = vunpack.c.l.b16 %v833
        %v870 = vunpack.c.l.b16 %v834
        %v871 = vunpack.c.l.b16 %v835
        %v872 = vunpack.c.l.b16 %v836
        %v873 = vunpack.c.l.b16 %v837
        %v874 = vunpack.c.l.b16 %v838
        %v875 = vunpack.c.l.b16 %v839
        %v876 = vunpack.c.l.b16 %v840
        %v877 = vunpack.c.l.b16 %v841
        %v878 = vunpack.c.l.b16 %v842
        %v879 = vunpack.c.l.b16 %v843
        %v880 = vunpack.c.l.b16 %v844
        %v881 = vunpack.c.l.b16 %v845
        %v882 = vunpack.c.l.b16 %v846
        %v883 = vpack.c.b16 %v868, %v867
        %v884 = vpack.c.b16 %v870, %v869
        %v885 = vpack.c.b16 %v872, %v871
        %v886 = vpack.c.b16 %v874, %v873
        %v887 = vpack.c.b16 %v876, %v875
        %v888 = vpack.c.b16 %v878, %v877
        %v889 = vpack.c.b16 %v880, %v879
        %v890 = vpack.c.b16 %v882, %v881
        %899 = vmatpush.bf16.msra.mxu0 %v890
        %900 = vmatpush.bf16.msra.mxu0 %v889
        %901 = vmatpush.bf16.msra.mxu0 %v888
        %902 = vmatpush.bf16.msra.mxu0 %v887
        %903 = vmatpush.bf16.msra.mxu0 %v886
        %904 = vmatpush.bf16.msra.mxu0 %v885
        %905 = vmatpush.bf16.msra.mxu0 %v884
        %906 = vmatpush.bf16.msra.mxu0 %v883
        %907 = vmatmul.bf16.gmra.mxu0 %v823
        %v908 = vpop.f32.mrf.mxu0
        %v909 = vadd.f32 %v849, %v908
        %v910 = vpop.f32.mrf.mxu0
        %v911 = vadd.f32 %v849, %v910
        %912 = vmatmul.bf16.gmra.mxu0 %v824
        %v913 = vpop.f32.mrf.mxu0
        %v914 = vadd.f32 %v849, %v913
        %v915 = vpop.f32.mrf.mxu0
        %v916 = vadd.f32 %v849, %v915
        %917 = vmatmul.bf16.gmra.mxu0 %v825
        %v918 = vpop.f32.mrf.mxu0
        %v919 = vadd.f32 %v849, %v918
        %v920 = vpop.f32.mrf.mxu0
        %v921 = vadd.f32 %v849, %v920
        %922 = vmatmul.bf16.gmra.mxu0 %v826
        %v923 = vpop.f32.mrf.mxu0
        %v924 = vadd.f32 %v849, %v923
        %v925 = vpop.f32.mrf.mxu0
        %v926 = vadd.f32 %v849, %v925
        %927 = vmatmul.bf16.gmra.mxu0 %v827
        %v928 = vpop.f32.mrf.mxu0
        %v929 = vadd.f32 %v849, %v928
        %v930 = vpop.f32.mrf.mxu0
        %v931 = vadd.f32 %v849, %v930
        %932 = vmatmul.bf16.gmra.mxu0 %v828
        %v933 = vpop.f32.mrf.mxu0
        %v934 = vadd.f32 %v849, %v933
        %v935 = vpop.f32.mrf.mxu0
        %v936 = vadd.f32 %v849, %v935
        %937 = vmatmul.bf16.gmra.mxu0 %v829
        %v938 = vpop.f32.mrf.mxu0
        %v939 = vadd.f32 %v849, %v938
        %v940 = vpop.f32.mrf.mxu0
        %v941 = vadd.f32 %v849, %v940
        %942 = vmatmul.bf16.gmra.mxu0 %v830
        %v943 = vpop.f32.mrf.mxu0
        %v944 = vadd.f32 %v849, %v943
        %v945 = vpop.f32.mrf.mxu0
        %v946 = vadd.f32 %v849, %v945
        %947 = vdwg.mxu0
        %vm948 = vcmp.ge.f32.partialorder %v909, 0.0
        %vm949 = vcmp.ge.f32.partialorder %v911, 0.0
        %vm950 = vcmp.ge.f32.partialorder %v914, 0.0
        %vm951 = vcmp.ge.f32.partialorder %v916, 0.0
        %vm952 = vcmp.ge.f32.partialorder %v919, 0.0
        %vm953 = vcmp.ge.f32.partialorder %v921, 0.0
        %vm954 = vcmp.ge.f32.partialorder %v924, 0.0
        %vm955 = vcmp.ge.f32.partialorder %v926, 0.0
        %vm956 = vcmp.ge.f32.partialorder %v929, 0.0
        %vm957 = vcmp.ge.f32.partialorder %v931, 0.0
        %vm958 = vcmp.ge.f32.partialorder %v934, 0.0
        %vm959 = vcmp.ge.f32.partialorder %v936, 0.0
        %vm960 = vcmp.ge.f32.partialorder %v939, 0.0
        %vm961 = vcmp.ge.f32.partialorder %v941, 0.0
        %vm962 = vcmp.ge.f32.partialorder %v944, 0.0
        %vm963 = vcmp.ge.f32.partialorder %v946, 0.0
        %v964 = vmul.f32 %v909, 0.02
        %v965 = vmul.f32 %v911, 0.02
        %v966 = vmul.f32 %v914, 0.02
        %v967 = vmul.f32 %v916, 0.02
        %v968 = vmul.f32 %v919, 0.02
        %v969 = vmul.f32 %v921, 0.02
        %v970 = vmul.f32 %v924, 0.02
        %v971 = vmul.f32 %v926, 0.02
        %v972 = vmul.f32 %v929, 0.02
        %v973 = vmul.f32 %v931, 0.02
        %v974 = vmul.f32 %v934, 0.02
        %v975 = vmul.f32 %v936, 0.02
        %v976 = vmul.f32 %v939, 0.02
        %v977 = vmul.f32 %v941, 0.02
        %v978 = vmul.f32 %v944, 0.02
        %v979 = vmul.f32 %v946, 0.02
        %v980 = vsel %vm948, %v909, %v964
        %v981 = vsel %vm949, %v911, %v965
        %v982 = vsel %vm950, %v914, %v966
        %v983 = vsel %vm951, %v916, %v967
        %v984 = vsel %vm952, %v919, %v968
        %v985 = vsel %vm953, %v921, %v969
        %v986 = vsel %vm954, %v924, %v970
        %v987 = vsel %vm955, %v926, %v971
        %v988 = vsel %vm956, %v929, %v972
        %v989 = vsel %vm957, %v931, %v973
        %v990 = vsel %vm958, %v934, %v974
        %v991 = vsel %vm959, %v936, %v975
        %v992 = vsel %vm960, %v939, %v976
        %v993 = vsel %vm961, %v941, %v977
        %v994 = vsel %vm962, %v944, %v978
        %v995 = vsel %vm963, %v946, %v979
        %996 = vst [vmem:[%s280] sm:$0xff] %v980
        %997 = vst [vmem:[%s280 + $0x8] sm:$0xff] %v981
        %998 = vst [vmem:[%s280 + $0x10] sm:$0xff] %v982
        %999 = vst [vmem:[%s280 + $0x18] sm:$0xff] %v983
        %1000 = vst [vmem:[%s280 + $0x20] sm:$0xff] %v984
        %1001 = vst [vmem:[%s280 + $0x28] sm:$0xff] %v985
        %1002 = vst [vmem:[%s280 + $0x30] sm:$0xff] %v986
        %1003 = vst [vmem:[%s280 + $0x38] sm:$0xff] %v987
        %1004 = vst [vmem:[%s280 + $0x40] sm:$0xff] %v988
        %1005 = vst [vmem:[%s280 + $0x48] sm:$0xff] %v989
        %1006 = vst [vmem:[%s280 + $0x50] sm:$0xff] %v990
        %1007 = vst [vmem:[%s280 + $0x58] sm:$0xff] %v991
        %1008 = vst [vmem:[%s280 + $0x60] sm:$0xff] %v992
        %1009 = vst [vmem:[%s280 + $0x68] sm:$0xff] %v993
        %1010 = vst [vmem:[%s280 + $0x70] sm:$0xff] %v994
        %1011 = vst [vmem:[%s280 + $0x78] sm:$0xff] %v995
        %s1012 = smul.u32 16, %s20
        %p1013 = scmp.lt.s32.totalorder %s1012, 63
        %s1014 = scalar_select %p1013, %s1012, 63
        %s1015 = smul.addr %s1014, 8
        %s1016 = scalar_lea.vmem %s5, %s1015
        // Predicated region
        $region53: #{classifier_forward.1} parent=39 // pred_check
          %p1017 = pneg %p148
        $region54: #{classifier_forward.1} parent=39 // pred_check_branch
          %1019 = sbr.rel (%p1017) target = $region56
        $region55: #{classifier_forward.1} parent=39 // pred_region
          %s1020 = smul.u32 16, %s20
        $region56: #{classifier_forward.1} parent=39 // pred_fallthru
          _
      $region40: #{classifier_forward.1} parent=5 // pred_fallthru
        _
      %p1021 = scmp.le.s32.totalorder 2, %s15
      // Predicated region
      $region57: #{classifier_forward.1} parent=5 // pred_check
        %p1022 = pneg %p1021
      $region58: #{classifier_forward.1} parent=5 // pred_check_branch
        %1024 = sbr.rel (%p1022) target = $region60
      $region59: #{classifier_forward.1} parent=5 // pred_region
        %s1025 = ssub.s32 %s15, 2
        // Predicated region
        $region61: #{classifier_forward.1} parent=59 // pred_check
          %p1026 = pneg %p154
        $region62: #{classifier_forward.1} parent=59 // pred_check_branch
          %1028 = sbr.rel (%p1026) target = $region64
        $region63: #{classifier_forward.1} parent=59 // pred_region
          %s1029 = smul.u32 16, %s21
          %p1030 = scmp.lt.s32.totalorder %s1029, 63
          %s1031 = scalar_select %p1030, %s1029, 63
          %s1032 = smul.addr %s1031, 8
          %s1033 = scalar_lea.vmem %s5, %s1032
        $region64: #{classifier_forward.1} parent=59 // pred_fallthru
          _
      $region60: #{classifier_forward.1} parent=5 // pred_fallthru
        _
    $region6: #{classifier_forward.1} parent=1 // loop_footer
      %s19 = sadd.s32 1, %s15
    $region7: #{classifier_forward.1} parent=1 // loop_footer_branch
      %14 = sbr.rel target = $region3
    $region8: #{classifier_forward.1} parent=1 // loop_exit
      _
    %1034 = vsyncpa [#allocation3], 1
    %s1035 = scalar_lea.sflag [#allocation3], 1
    %1036 = vsyncpa %s1035, 1
    %1037 = vsyncpa [#allocation5], 1

</llo_original>
